<compile_context>
chip_gen: v6e
topology: v6e:2x2x1
jax: 0.10.0
libtpu: 0.0.40
codegen_flags: <defaults>
</compile_context>

<pallas_src>
import jax
import jax.numpy as jnp
from jax.experimental import pallas as pl
from jax.experimental.pallas import tpu as pltpu

NEG_SLOPE = 0.01     # nn.LeakyReLU default
N_LAYERS = 5         # fused forward = 5 dense matmuls
MAX_TB = 2048        # max batch-tile rows
SUBLANE = 16         # bf16 sublane packing


def _round_up(n, m):
    return ((n + m - 1) // m) * m


# ---------------------------------------------------------------------------
# Kernel: whole fused forward for one batch tile.
#   x_ref  : (TB, kin)        bf16, zero-padded concat(x0, x1)
#   w1_ref : (kin, LANE)      bf16, layer-1 weight (narrow K)
#   w_ref  : (4, LANE, LANE)  bf16, layers 2..5 weight slab (resident)
#   b_ref  : (5, LANE)        f32,  bias slab               (resident)
#   o_ref  : (TB, LANE)       bf16, lane-dense output; col 0.. are the result
# Padding columns stay exactly 0 through every layer (0*w=0, pad bias=0,
# leaky_relu(0)=0), so valid columns match the unpadded math.
# ---------------------------------------------------------------------------
def fused_mlp_kernel(x_ref, w1_ref, w_ref, b_ref, o_ref):
    # Layer 1: narrow-K matmul (K = kin), f32 accumulate.
    h = jnp.dot(x_ref[...], w1_ref[...], preferred_element_type=jnp.float32)
    h = h + b_ref[0:1, :]
    h = jnp.maximum(h, NEG_SLOPE * h)                       # LeakyReLU
    # Layers 2..5: 128x128 bf16 MXU tiles, static unroll.
    for i in range(N_LAYERS - 1):
        h = jnp.dot(h.astype(jnp.bfloat16), w_ref[i],
                    preferred_element_type=jnp.float32) + b_ref[i + 1:i + 2, :]
        if i < N_LAYERS - 2:                                # no activation after last
            h = jnp.maximum(h, NEG_SLOPE * h)
    # self.activation == 'sigmoid' is False in the reference (tuple vs str): no sigmoid.
    o_ref[...] = h.astype(o_ref.dtype)


# ---------------------------------------------------------------------------
# One-time parameter fusion + packing (plain JAX, hoisted out of the call path).
# ---------------------------------------------------------------------------
def pack_params(params, input_neurons, hidden, out_neuron):
    (s0w1, s0b1, s0w2, s0b2, s0w3, s0b3,
     s1w1, s1b1, s1w2, s1b2, s1w3, s1b3,
     ow1, ob1, ow2, ob2, ow3, ob3) = params
    H = hidden
    d0, d1 = input_neurons
    din = d0 + d1
    kin = max(SUBLANE, _round_up(din, SUBLANE))
    lane = _round_up(max(2 * H, out_neuron, 128), 128)

    # Layer 1: block-diagonal fusion of the two submodels' first Linear.
    W1 = jnp.zeros((din, 2 * H), jnp.float32)
    W1 = W1.at[:d0, :H].set(s0w1).at[d0:, H:].set(s1w1)
    b1 = jnp.concatenate([s0b1, s1b1], axis=1)                              # (1, 2H)

    # Layer 2: block-diagonal fusion of the two submodels' second Linear.
    W2 = jnp.zeros((2 * H, 2 * H), jnp.float32)
    W2 = W2.at[:H, :H].set(s0w2).at[H:, H:].set(s1w2)
    b2 = jnp.concatenate([s0b2, s1b2], axis=1)                              # (1, 2H)

    # Layer 3: fold (H,1) submodel heads + (2,H) concat-Linear into one (2H,H).
    Wc = jnp.concatenate([s0w3 * ow1[0:1, :], s1w3 * ow1[1:2, :]], axis=0)  # (2H, H)
    bc = ob1 + s0b3 * ow1[0:1, :] + s1b3 * ow1[1:2, :]                      # (1, H)

    # Narrow-K layer-1 tile.
    W1p = jnp.zeros((kin, lane), jnp.float32).at[:din, :2 * H].set(W1)

    mats = [W2, Wc, ow2, ow3]
    biases = [b1, b2, bc, ob2, ob3]

    Ws = jnp.zeros((N_LAYERS - 1, lane, lane), jnp.float32)
    for i, w in enumerate(mats):
        r, c = w.shape
        Ws = Ws.at[i, :r, :c].set(w)
    Bs = jnp.zeros((N_LAYERS, lane), jnp.float32)
    for i, b in enumerate(biases):
        Bs = Bs.at[i, :b.shape[1]].set(b[0])

    return (W1p.astype(jnp.bfloat16), Ws.astype(jnp.bfloat16), Bs,
            kin, lane, din)


def _choose_tiling(B):
    """Balanced batch tiles, >=2 when possible (v7x megacore), <=MAX_TB rows."""
    n_tiles = max(2, pl.cdiv(B, MAX_TB))
    tb = min(MAX_TB, max(SUBLANE, _round_up(pl.cdiv(B, n_tiles), SUBLANE)))
    bp = _round_up(B, tb)
    return tb, bp


def make_hierarchical_nn(params, input_neurons, hidden, out_neuron):
    """Packs/fuses the weights ONCE and returns a jitted forward(x0, x1)."""
    W1p, Ws, Bs, kin, lane, din = pack_params(params, input_neurons, hidden,
                                              out_neuron)
    W1p, Ws, Bs = jax.device_put(W1p), jax.device_put(Ws), jax.device_put(Bs)

    @jax.jit
    def forward(x0, x1):
        B = x0.shape[0]
        tb, bp = _choose_tiling(B)
        grid = (bp // tb,)

        xcat = jnp.concatenate([x0, x1], axis=1).astype(jnp.bfloat16)
        xp = jnp.zeros((bp, kin), jnp.bfloat16).at[:B, :din].set(xcat)

        flops = 2 * bp * (kin * lane + (N_LAYERS - 1) * lane * lane)
        bytes_accessed = int(2 * (bp * kin + bp * lane + W1p.size + Ws.size)
                             + 4 * Bs.size)

        out = pl.pallas_call(
            fused_mlp_kernel,
            out_shape=jax.ShapeDtypeStruct((bp, lane), jnp.bfloat16),
            grid=grid,
            in_specs=[
                pl.BlockSpec((tb, kin), lambda i: (i, 0)),               # streamed x
                pl.BlockSpec((kin, lane), lambda i: (0, 0)),             # resident W1
                pl.BlockSpec((N_LAYERS - 1, lane, lane),
                             lambda i: (0, 0, 0)),                       # resident Ws
                pl.BlockSpec((N_LAYERS, lane), lambda i: (0, 0)),        # resident Bs
            ],
            out_specs=pl.BlockSpec((tb, lane), lambda i: (i, 0)),        # lane-dense
            compiler_params=pltpu.CompilerParams(
                dimension_semantics=("parallel",),
                vmem_limit_bytes=32 * 1024 * 1024),
            cost_estimate=pl.CostEstimate(
                flops=flops, transcendentals=0, bytes_accessed=bytes_accessed),
        )(xp, W1p, Ws, Bs)

        # Lane-dense slab written in-kernel; slice valid rows/cols here.
        return out[:B, :out_neuron].astype(jnp.float32)

    return forward


# ---------------------------------------------------------------------------
# Deterministic init + pure-JAX f32 reference (un-fused, mirrors PyTorch graph).
# ---------------------------------------------------------------------------
def init_params(key, input_neurons, hidden, out_neuron):
    """nn.Linear weights stored transposed as (in, out); biases as (1, out)."""
    keys = iter(jax.random.split(key, 32))

    def lin(din, dout, scale=0.1):
        w = scale * jax.random.normal(next(keys), (din, dout), jnp.float32)
        b = scale * jax.random.normal(next(keys), (1, dout), jnp.float32)
        return w, b

    params = []
    for din in input_neurons:                     # submodels
        w1, b1 = lin(din, hidden)
        w2, b2 = lin(hidden, hidden)
        w3, b3 = lin(hidden, 1)
        params += [w1, b1, w2, b2, w3, b3]
    ow1, ob1 = lin(len(input_neurons), hidden)    # output layer
    ow2, ob2 = lin(hidden, hidden)
    ow3, ob3 = lin(hidden, out_neuron)
    params += [ow1, ob1, ow2, ob2, ow3, ob3]
    return params


def reference_forward(x0, x1, params):
    (s0w1, s0b1, s0w2, s0b2, s0w3, s0b3,
     s1w1, s1b1, s1w2, s1b2, s1w3, s1b3,
     ow1, ob1, ow2, ob2, ow3, ob3) = params

    def lrelu(v):
        return jnp.where(v > 0, v, NEG_SLOPE * v)

    def sub(x, w1, b1, w2, b2, w3, b3):
        h = lrelu(x @ w1 + b1)
        h = lrelu(h @ w2 + b2)
        return h @ w3 + b3

    f0 = sub(x0, s0w1, s0b1, s0w2, s0b2, s0w3, s0b3)
    f1 = sub(x1, s1w1, s1b1, s1w2, s1b2, s1w3, s1b3)
    f = jnp.concatenate([f0, f1], axis=1)
    h = lrelu(f @ ow1 + ob1)
    h = lrelu(h @ ow2 + ob2)
    return h @ ow3 + ob3        # no sigmoid (tuple-comparison bug reproduced)


if __name__ == "__main__":
    input_neurons = [16, 8]
    hidden_neuron = 32
    out_neuron = 1
    batch = 8

    key = jax.random.PRNGKey(0)
    kx0, kx1, kp = jax.random.split(key, 3)
    x0 = jax.random.normal(kx0, (batch, input_neurons[0]), jnp.float32)
    x1 = jax.random.normal(kx1, (batch, input_neurons[1]), jnp.float32)
    params = init_params(kp, input_neurons, hidden_neuron, out_neuron)

    forward = make_hierarchical_nn(params, input_neurons, hidden_neuron, out_neuron)
    out = jax.block_until_ready(forward(x0, x1))

    ref = reference_forward(x0, x1, params)
    assert out.shape == (batch, out_neuron)
    # bf16 MXU operands + bf16 output slab vs a pure-f32 reference: allow a
    # correspondingly looser (but still tight for these magnitudes) tolerance.
    assert jnp.allclose(out, ref, atol=2e-2, rtol=2e-2), "mismatch vs JAX reference"

    print("KERNEL_OK")
</pallas_src>

<mosaic_0001>
module attributes {stable_mosaic.version = 11 : i64} {
  func.func @fused_mlp_kernel(%arg0: i32, %arg1: memref<16x32xbf16, #tpu.memory_space<vmem>>, %arg2: memref<32x128xbf16, #tpu.memory_space<vmem>>, %arg3: memref<4x128x128xbf16, #tpu.memory_space<vmem>>, %arg4: memref<5x128xf32, #tpu.memory_space<vmem>>, %arg5: memref<16x128xbf16, #tpu.memory_space<vmem>>) attributes {dimension_semantics = [#tpu.dimension_semantics<parallel>], iteration_bounds = array<i64: 1>, scalar_prefetch = 0 : i64, scratch_operands = 0 : i64, tpu.core_type = #tpu.core_type<tc>, window_params = [{transform_indices = @transform_0, window_bounds = array<i64: 16, 32>}, {pipeline_mode = #tpu.pipeline_mode<synchronous>, transform_indices = @transform_1, window_bounds = array<i64: 32, 128>}, {pipeline_mode = #tpu.pipeline_mode<synchronous>, transform_indices = @transform_2, window_bounds = array<i64: 4, 128, 128>}, {pipeline_mode = #tpu.pipeline_mode<synchronous>, transform_indices = @transform_3, window_bounds = array<i64: 5, 128>}, {transform_indices = @transform_4, window_bounds = array<i64: 16, 128>}]} {
    %c0 = arith.constant 0 : index
    %c0_0 = arith.constant 0 : index
    %0 = vector.load %arg1[%c0, %c0_0] : memref<16x32xbf16, #tpu.memory_space<vmem>>, vector<16x32xbf16>
    %c0_1 = arith.constant 0 : index
    %c0_2 = arith.constant 0 : index
    %1 = vector.load %arg2[%c0_1, %c0_2] : memref<32x128xbf16, #tpu.memory_space<vmem>>, vector<32x128xbf16>
    %cst = arith.constant dense<0.000000e+00> : vector<16x128xf32>
    %2 = tpu.matmul %0, %1, %cst {dimension_numbers = #tpu.dot_dimension_numbers<[1], [0], [0], [1], [0, 0, 1, 1], [], []>} : vector<16x32xbf16>, vector<32x128xbf16>, vector<16x128xf32> -> vector<16x128xf32>
    %c0_3 = arith.constant 0 : index
    %c0_4 = arith.constant 0 : index
    %3 = vector.load %arg4[%c0_3, %c0_4] : memref<5x128xf32, #tpu.memory_space<vmem>>, vector<1x128xf32>
    %4 = vector.broadcast %3 : vector<1x128xf32> to vector<16x128xf32>
    %5 = arith.addf %2, %4 : vector<16x128xf32>
    %cst_5 = arith.constant 0.00999999977 : f32
    %6 = vector.broadcast %cst_5 : f32 to vector<16x128xf32>
    %7 = arith.mulf %6, %5 : vector<16x128xf32>
    %8 = arith.maximumf %5, %7 : vector<16x128xf32>
    %9 = arith.truncf %8 : vector<16x128xf32> to vector<16x128xbf16>
    %c0_6 = arith.constant 0 : index
    %c0_7 = arith.constant 0 : index
    %c0_8 = arith.constant 0 : index
    %10 = vector.load %arg3[%c0_6, %c0_7, %c0_8] : memref<4x128x128xbf16, #tpu.memory_space<vmem>>, vector<1x128x128xbf16>
    %11 = vector.shape_cast %10 : vector<1x128x128xbf16> to vector<128x128xbf16>
    %cst_9 = arith.constant dense<0.000000e+00> : vector<16x128xf32>
    %12 = tpu.matmul %9, %11, %cst_9 {dimension_numbers = #tpu.dot_dimension_numbers<[1], [0], [0], [1], [0, 0, 1, 1], [], []>} : vector<16x128xbf16>, vector<128x128xbf16>, vector<16x128xf32> -> vector<16x128xf32>
    %c1 = arith.constant 1 : index
    %c0_10 = arith.constant 0 : index
    %13 = vector.load %arg4[%c1, %c0_10] : memref<5x128xf32, #tpu.memory_space<vmem>>, vector<1x128xf32>
    %14 = vector.broadcast %13 : vector<1x128xf32> to vector<16x128xf32>
    %15 = arith.addf %12, %14 : vector<16x128xf32>
    %cst_11 = arith.constant 0.00999999977 : f32
    %16 = vector.broadcast %cst_11 : f32 to vector<16x128xf32>
    %17 = arith.mulf %16, %15 : vector<16x128xf32>
    %18 = arith.maximumf %15, %17 : vector<16x128xf32>
    %19 = arith.truncf %18 : vector<16x128xf32> to vector<16x128xbf16>
    %c1_12 = arith.constant 1 : index
    %c0_13 = arith.constant 0 : index
    %c0_14 = arith.constant 0 : index
    %20 = vector.load %arg3[%c1_12, %c0_13, %c0_14] : memref<4x128x128xbf16, #tpu.memory_space<vmem>>, vector<1x128x128xbf16>
    %21 = vector.shape_cast %20 : vector<1x128x128xbf16> to vector<128x128xbf16>
    %cst_15 = arith.constant dense<0.000000e+00> : vector<16x128xf32>
    %22 = tpu.matmul %19, %21, %cst_15 {dimension_numbers = #tpu.dot_dimension_numbers<[1], [0], [0], [1], [0, 0, 1, 1], [], []>} : vector<16x128xbf16>, vector<128x128xbf16>, vector<16x128xf32> -> vector<16x128xf32>
    %c2 = arith.constant 2 : index
    %c0_16 = arith.constant 0 : index
    %23 = vector.load %arg4[%c2, %c0_16] : memref<5x128xf32, #tpu.memory_space<vmem>>, vector<1x128xf32>
    %24 = vector.broadcast %23 : vector<1x128xf32> to vector<16x128xf32>
    %25 = arith.addf %22, %24 : vector<16x128xf32>
    %cst_17 = arith.constant 0.00999999977 : f32
    %26 = vector.broadcast %cst_17 : f32 to vector<16x128xf32>
    %27 = arith.mulf %26, %25 : vector<16x128xf32>
    %28 = arith.maximumf %25, %27 : vector<16x128xf32>
    %29 = arith.truncf %28 : vector<16x128xf32> to vector<16x128xbf16>
    %c2_18 = arith.constant 2 : index
    %c0_19 = arith.constant 0 : index
    %c0_20 = arith.constant 0 : index
    %30 = vector.load %arg3[%c2_18, %c0_19, %c0_20] : memref<4x128x128xbf16, #tpu.memory_space<vmem>>, vector<1x128x128xbf16>
    %31 = vector.shape_cast %30 : vector<1x128x128xbf16> to vector<128x128xbf16>
    %cst_21 = arith.constant dense<0.000000e+00> : vector<16x128xf32>
    %32 = tpu.matmul %29, %31, %cst_21 {dimension_numbers = #tpu.dot_dimension_numbers<[1], [0], [0], [1], [0, 0, 1, 1], [], []>} : vector<16x128xbf16>, vector<128x128xbf16>, vector<16x128xf32> -> vector<16x128xf32>
    %c3 = arith.constant 3 : index
    %c0_22 = arith.constant 0 : index
    %33 = vector.load %arg4[%c3, %c0_22] : memref<5x128xf32, #tpu.memory_space<vmem>>, vector<1x128xf32>
    %34 = vector.broadcast %33 : vector<1x128xf32> to vector<16x128xf32>
    %35 = arith.addf %32, %34 : vector<16x128xf32>
    %cst_23 = arith.constant 0.00999999977 : f32
    %36 = vector.broadcast %cst_23 : f32 to vector<16x128xf32>
    %37 = arith.mulf %36, %35 : vector<16x128xf32>
    %38 = arith.maximumf %35, %37 : vector<16x128xf32>
    %39 = arith.truncf %38 : vector<16x128xf32> to vector<16x128xbf16>
    %c3_24 = arith.constant 3 : index
    %c0_25 = arith.constant 0 : index
    %c0_26 = arith.constant 0 : index
    %40 = vector.load %arg3[%c3_24, %c0_25, %c0_26] : memref<4x128x128xbf16, #tpu.memory_space<vmem>>, vector<1x128x128xbf16>
    %41 = vector.shape_cast %40 : vector<1x128x128xbf16> to vector<128x128xbf16>
    %cst_27 = arith.constant dense<0.000000e+00> : vector<16x128xf32>
    %42 = tpu.matmul %39, %41, %cst_27 {dimension_numbers = #tpu.dot_dimension_numbers<[1], [0], [0], [1], [0, 0, 1, 1], [], []>} : vector<16x128xbf16>, vector<128x128xbf16>, vector<16x128xf32> -> vector<16x128xf32>
    %c4 = arith.constant 4 : index
    %c0_28 = arith.constant 0 : index
    %43 = vector.load %arg4[%c4, %c0_28] : memref<5x128xf32, #tpu.memory_space<vmem>>, vector<1x128xf32>
    %44 = vector.broadcast %43 : vector<1x128xf32> to vector<16x128xf32>
    %45 = arith.addf %42, %44 : vector<16x128xf32>
    %46 = arith.truncf %45 : vector<16x128xf32> to vector<16x128xbf16>
    %c0_29 = arith.constant 0 : index
    %c0_30 = arith.constant 0 : index
    %47 = vector.load %arg5[%c0_29, %c0_30] : memref<16x128xbf16, #tpu.memory_space<vmem>>, vector<16x128xbf16>
    tpu.vector_store %arg5[%c0_29, %c0_30], %46 {strides = array<i32>} : memref<16x128xbf16, #tpu.memory_space<vmem>>, vector<16x128xbf16>,
    return
  }
  func.func @transform_0(%arg0: i32) -> (i32, i32) {
    %c0_i32 = arith.constant 0 : i32
    %c0_i32_0 = arith.constant 0 : i32
    return %arg0, %c0_i32 : i32, i32
  }
  func.func @transform_1(%arg0: i32) -> (i32, i32) {
    %c0_i32 = arith.constant 0 : i32
    %c0_i32_0 = arith.constant 0 : i32
    %c0_i32_1 = arith.constant 0 : i32
    return %c0_i32, %c0_i32_0 : i32, i32
  }
  func.func @transform_2(%arg0: i32) -> (i32, i32, i32) {
    %c0_i32 = arith.constant 0 : i32
    %c0_i32_0 = arith.constant 0 : i32
    %c0_i32_1 = arith.constant 0 : i32
    %c0_i32_2 = arith.constant 0 : i32
    return %c0_i32, %c0_i32_0, %c0_i32_1 : i32, i32, i32
  }
  func.func @transform_3(%arg0: i32) -> (i32, i32) {
    %c0_i32 = arith.constant 0 : i32
    %c0_i32_0 = arith.constant 0 : i32
    %c0_i32_1 = arith.constant 0 : i32
    return %c0_i32, %c0_i32_0 : i32, i32
  }
  func.func @transform_4(%arg0: i32) -> (i32, i32) {
    %c0_i32 = arith.constant 0 : i32
    %c0_i32_0 = arith.constant 0 : i32
    return %arg0, %c0_i32 : i32, i32
  }
}

</mosaic_0001>

<llo_original>
// kernel: forward.1
$region0: #{forward.1}
  #allocation0 [shape = 'u32[]', space=smem, size = 0x4, offset = 0x4, fixed_abs, tag = 'smem constant byte address 0x4 - core index']
  #allocation1 [shape = 'u32[144,128]{1,0:T(1,128)}', space=vmem, size = 0x12000, scoped, tag = 'internal scratch']
  %s0 = inlined_call_operand.vmem [shape: bf16[16,32], index: 0, kind: input, shape index: {}]
  %s1 = inlined_call_operand.vmem [shape: bf16[32,128], index: 1, kind: input, shape index: {}]
  %s2 = inlined_call_operand.hbm [shape: bf16[4,128,128], index: 2, kind: input, shape index: {}]
  %s3 = inlined_call_operand.vmem [shape: f32[5,128], index: 3, kind: input, shape index: {}]
  %s4 = inlined_call_operand.vmem [shape: bf16[16,128], index: 4, kind: output, shape index: {}]
  %s5 = sld [smem:[#allocation0]]
  $region30: #{forward.1} parent=0
    _
  %s7 = ssub.s32 1, %s5
  %s8 = scalar_select 0, %s7, %s5
  $region1: #{forward.1} parent=0
    #allocation2 [shape = 'u8[131072]{0}', space=vmem, size = 0x20000, scoped, tag = 'input window, operand 2, single buffered']
    #allocation3 [shape = 's32[1]{0}', space=sflag, size = 0x4, scoped, tag = 'scoped memory for forward.1']
    %9 = vsyncpa [#allocation3], 0
    // Predicated region
    $region2: #{forward.1} parent=1 // pred_check
      _
    $region3: #{forward.1} parent=1 // pred_check_branch
      %11 = sbr.rel (0) target = $region5
    $region4: #{forward.1} parent=1 // pred_region
      _
    $region5: #{forward.1} parent=1 // pred_fallthru
      _
    // Predicated region
    $region6: #{forward.1} parent=1 // pred_check
      _
    $region7: #{forward.1} parent=1 // pred_check_branch
      %13 = sbr.rel (0) target = $region9
    $region8: #{forward.1} parent=1 // pred_region
      _
    $region9: #{forward.1} parent=1 // pred_fallthru
      _
    // Predicated region
    $region10: #{forward.1} parent=1 // pred_check
      _
    $region11: #{forward.1} parent=1 // pred_check_branch
      %15 = sbr.rel (0) target = $region13
    $region12: #{forward.1} parent=1 // pred_region
      %s17 = ssub.s32 4096, 4096
      %18 = vsyncadd [#allocation3], %s17
      %s19 = sshll.u32 [#allocation2], 4
      %s20 = int_to_ptr.vmem [resolvable:$true] %s19
      %25 = dma.hbm_to_vmem [thread:$0]  %s2, 4096, %s20, [#allocation3], 64, 64, 4
    $region13: #{forward.1} parent=1 // pred_fallthru
      _
    // Predicated region
    $region14: #{forward.1} parent=1 // pred_check
      _
    $region15: #{forward.1} parent=1 // pred_check_branch
      %27 = sbr.rel (0) target = $region17
    $region16: #{forward.1} parent=1 // pred_region
      _
    $region17: #{forward.1} parent=1 // pred_fallthru
      _
    // Predicated region
    $region18: #{forward.1} parent=1 // pred_check
      _
    $region19: #{forward.1} parent=1 // pred_check_branch
      %29 = sbr.rel (0) target = $region21
    $region20: #{forward.1} parent=1 // pred_region
      %30 = dma.done [#allocation3], 4096
    $region21: #{forward.1} parent=1 // pred_fallthru
      _
    %v32 = vld [vmem:[%s0] sm:$0xf]
    %v33 = vld [vmem:[%s0 + $0x4] sm:$0xf]
    %v34 = vld [vmem:[%s1] sm:$0xf]
    %v35 = vld [vmem:[%s1 + $0x4] sm:$0xf]
    %v36 = vld [vmem:[%s1 + $0x8] sm:$0xf]
    %v37 = vld [vmem:[%s1 + $0xc] sm:$0xf]
    %v38 = vld [vmem:[%s3] sm:$0x1]
    %v39 = vlaneseq
    %v40 = vshrl.u32 %v39, 7
    %v41 = vsub.s32 0, %v40
    %v42 = vrot.slane %v38, %v41
    %v45 = vunpack.c.l.b16 %v32
    %v46 = vunpack.c.l.b16 %v33
    %v47 = vpack.c.b16 %v46, %v45
    %v52 = vunpack.c.l.b16 %v34
    %v53 = vunpack.c.l.b16 %v35
    %v54 = vunpack.c.l.b16 %v36
    %v55 = vunpack.c.l.b16 %v37
    %v56 = vpack.c.b16 %v53, %v52
    %v57 = vpack.c.b16 %v55, %v54
    %vm60 = vcmask 261120
    %v62 = vsel %vm60, %v47, 0
    %64 = vmatprep.subr.bf16.mxu0 0
    %65 = vmatpush1.bf16.msra.mxu0 0
    %66 = vmatprep.subr.bf16.mxu0 0
    %67 = vmatpush1.bf16.msra.mxu0 0
    %68 = vmatprep.subr.bf16.mxu0 0
    %69 = vmatpush1.bf16.msra.mxu0 0
    %70 = vmatprep.subr.bf16.mxu0 0
    %71 = vmatpush1.bf16.msra.mxu0 0
    %72 = vmatprep.subr.bf16.mxu0 0
    %73 = vmatpush1.bf16.msra.mxu0 0
    %74 = vmatprep.subr.bf16.mxu0 0
    %75 = vmatpush1.bf16.msra.mxu0 0
    %76 = vmatprep.subr.bf16.mxu0 0
    %77 = vmatpush1.bf16.msra.mxu0 %v57
    %78 = vmatprep.subr.bf16.mxu0 0
    %79 = vmatpush1.bf16.msra.mxu0 %v56
    %80 = vmatprep.subr.bf16.mxu0 0
    %81 = vmatpush2.bf16.msra.mxu0 0
    %82 = vmatprep.subr.bf16.mxu0 0
    %83 = vmatpush2.bf16.msra.mxu0 0
    %84 = vmatprep.subr.bf16.mxu0 0
    %85 = vmatpush2.bf16.msra.mxu0 0
    %86 = vmatprep.subr.bf16.mxu0 0
    %87 = vmatpush2.bf16.msra.mxu0 0
    %88 = vmatprep.subr.bf16.mxu0 0
    %89 = vmatpush2.bf16.msra.mxu0 0
    %90 = vmatprep.subr.bf16.mxu0 0
    %91 = vmatpush2.bf16.msra.mxu0 0
    %92 = vmatprep.subr.bf16.mxu0 0
    %93 = vmatpush2.bf16.msra.mxu0 0
    %94 = vmatprep.subr.bf16.mxu0 0
    %95 = vmatpush2.bf16.msra.mxu0 0
    %96 = vmatprep.mubr.bf16.mxu0 0
    %97 = vmatmul.mubr.bf16.gmra.mxu0 %v62
    %v98 = vpop.f32.mrf.mxu0
    %v99 = vadd.f32 %v42, %v98
    %v100 = vpop.f32.mrf.mxu0
    %v101 = vpop.f32.mrf.mxu0
    %v102 = vadd.f32 %v42, %v101
    %v103 = vpop.f32.mrf.mxu0
    %104 = vdwg.mxu0
    %v105 = vmul.f32 %v99, 0.01
    %v106 = vmul.f32 %v102, 0.01
    %v107 = vmax.f32 %v99, %v105
    %v108 = vmax.f32 %v102, %v106
    %v109 = vpack.c.bf16 %v108, %v107
    %v110 = vld [vmem:[#allocation2] sm:$0xf]
    %v111 = vld [vmem:[#allocation2 + $0x4] sm:$0xf]
    %v112 = vld [vmem:[#allocation2 + $0x8] sm:$0xf]
    %v113 = vld [vmem:[#allocation2 + $0xc] sm:$0xf]
    %v114 = vld [vmem:[#allocation2 + $0x10] sm:$0xf]
    %v115 = vld [vmem:[#allocation2 + $0x14] sm:$0xf]
    %v116 = vld [vmem:[#allocation2 + $0x18] sm:$0xf]
    %v117 = vld [vmem:[#allocation2 + $0x1c] sm:$0xf]
    %v118 = vld [vmem:[#allocation2 + $0x20] sm:$0xf]
    %v119 = vld [vmem:[#allocation2 + $0x24] sm:$0xf]
    %v120 = vld [vmem:[#allocation2 + $0x28] sm:$0xf]
    %v121 = vld [vmem:[#allocation2 + $0x2c] sm:$0xf]
    %v122 = vld [vmem:[#allocation2 + $0x30] sm:$0xf]
    %v123 = vld [vmem:[#allocation2 + $0x34] sm:$0xf]
    %v124 = vld [vmem:[#allocation2 + $0x38] sm:$0xf]
    %v125 = vld [vmem:[#allocation2 + $0x3c] sm:$0xf]
    %v126 = vld [vmem:[%s3 + $0x1] sm:$0x1]
    %v127 = vlaneseq
    %v128 = vshrl.u32 %v127, 7
    %v129 = vsub.s32 0, %v128
    %v130 = vrot.slane %v126, %v129
    %v147 = vunpack.c.l.b16 %v110
    %v148 = vunpack.c.l.b16 %v111
    %v149 = vunpack.c.l.b16 %v112
    %v150 = vunpack.c.l.b16 %v113
    %v151 = vunpack.c.l.b16 %v114
    %v152 = vunpack.c.l.b16 %v115
    %v153 = vunpack.c.l.b16 %v116
    %v154 = vunpack.c.l.b16 %v117
    %v155 = vunpack.c.l.b16 %v118
    %v156 = vunpack.c.l.b16 %v119
    %v157 = vunpack.c.l.b16 %v120
    %v158 = vunpack.c.l.b16 %v121
    %v159 = vunpack.c.l.b16 %v122
    %v160 = vunpack.c.l.b16 %v123
    %v161 = vunpack.c.l.b16 %v124
    %v162 = vunpack.c.l.b16 %v125
    %v163 = vpack.c.b16 %v148, %v147
    %v164 = vpack.c.b16 %v150, %v149
    %v165 = vpack.c.b16 %v152, %v151
    %v166 = vpack.c.b16 %v154, %v153
    %v167 = vpack.c.b16 %v156, %v155
    %v168 = vpack.c.b16 %v158, %v157
    %v169 = vpack.c.b16 %v160, %v159
    %v170 = vpack.c.b16 %v162, %v161
    %179 = vmatprep.subr.bf16.mxu0 0
    %180 = vmatpush1.bf16.msra.mxu0 %v170
    %181 = vmatprep.subr.bf16.mxu0 0
    %182 = vmatpush1.bf16.msra.mxu0 %v169
    %183 = vmatprep.subr.bf16.mxu0 0
    %184 = vmatpush1.bf16.msra.mxu0 %v168
    %185 = vmatprep.subr.bf16.mxu0 0
    %186 = vmatpush1.bf16.msra.mxu0 %v167
    %187 = vmatprep.subr.bf16.mxu0 0
    %188 = vmatpush1.bf16.msra.mxu0 %v166
    %189 = vmatprep.subr.bf16.mxu0 0
    %190 = vmatpush1.bf16.msra.mxu0 %v165
    %191 = vmatprep.subr.bf16.mxu0 0
    %192 = vmatpush1.bf16.msra.mxu0 %v164
    %193 = vmatprep.subr.bf16.mxu0 0
    %194 = vmatpush1.bf16.msra.mxu0 %v163
    %195 = vmatprep.subr.bf16.mxu0 0
    %196 = vmatpush2.bf16.msra.mxu0 0
    %197 = vmatprep.subr.bf16.mxu0 0
    %198 = vmatpush2.bf16.msra.mxu0 0
    %199 = vmatprep.subr.bf16.mxu0 0
    %200 = vmatpush2.bf16.msra.mxu0 0
    %201 = vmatprep.subr.bf16.mxu0 0
    %202 = vmatpush2.bf16.msra.mxu0 0
    %203 = vmatprep.subr.bf16.mxu0 0
    %204 = vmatpush2.bf16.msra.mxu0 0
    %205 = vmatprep.subr.bf16.mxu0 0
    %206 = vmatpush2.bf16.msra.mxu0 0
    %207 = vmatprep.subr.bf16.mxu0 0
    %208 = vmatpush2.bf16.msra.mxu0 0
    %209 = vmatprep.subr.bf16.mxu0 0
    %210 = vmatpush2.bf16.msra.mxu0 0
    %211 = vmatprep.mubr.bf16.mxu0 0
    %212 = vmatmul.mubr.bf16.gmra.mxu0 %v109
    %v213 = vpop.f32.mrf.mxu0
    %v214 = vadd.f32 %v130, %v213
    %v215 = vpop.f32.mrf.mxu0
    %v216 = vpop.f32.mrf.mxu0
    %v217 = vadd.f32 %v130, %v216
    %v218 = vpop.f32.mrf.mxu0
    %219 = vdwg.mxu0
    %v220 = vmul.f32 %v214, 0.01
    %v221 = vmul.f32 %v217, 0.01
    %v222 = vmax.f32 %v214, %v220
    %v223 = vmax.f32 %v217, %v221
    %v224 = vpack.c.bf16 %v223, %v222
    %s225 = scalar_lea.vmem [#allocation2], 64
    %v226 = vld [vmem:[%s225] sm:$0xf]
    %v227 = vld [vmem:[%s225 + $0x4] sm:$0xf]
    %v228 = vld [vmem:[%s225 + $0x8] sm:$0xf]
    %v229 = vld [vmem:[%s225 + $0xc] sm:$0xf]
    %v230 = vld [vmem:[%s225 + $0x10] sm:$0xf]
    %v231 = vld [vmem:[%s225 + $0x14] sm:$0xf]
    %v232 = vld [vmem:[%s225 + $0x18] sm:$0xf]
    %v233 = vld [vmem:[%s225 + $0x1c] sm:$0xf]
    %v234 = vld [vmem:[%s225 + $0x20] sm:$0xf]
    %v235 = vld [vmem:[%s225 + $0x24] sm:$0xf]
    %v236 = vld [vmem:[%s225 + $0x28] sm:$0xf]
    %v237 = vld [vmem:[%s225 + $0x2c] sm:$0xf]
    %v238 = vld [vmem:[%s225 + $0x30] sm:$0xf]
    %v239 = vld [vmem:[%s225 + $0x34] sm:$0xf]
    %v240 = vld [vmem:[%s225 + $0x38] sm:$0xf]
    %v241 = vld [vmem:[%s225 + $0x3c] sm:$0xf]
    %v242 = vld [vmem:[%s3 + $0x2] sm:$0x1]
    %v243 = vlaneseq
    %v244 = vshrl.u32 %v243, 7
    %v245 = vsub.s32 0, %v244
    %v246 = vrot.slane %v242, %v245
    %v263 = vunpack.c.l.b16 %v226
    %v264 = vunpack.c.l.b16 %v227
    %v265 = vunpack.c.l.b16 %v228
    %v266 = vunpack.c.l.b16 %v229
    %v267 = vunpack.c.l.b16 %v230
    %v268 = vunpack.c.l.b16 %v231
    %v269 = vunpack.c.l.b16 %v232
    %v270 = vunpack.c.l.b16 %v233
    %v271 = vunpack.c.l.b16 %v234
    %v272 = vunpack.c.l.b16 %v235
    %v273 = vunpack.c.l.b16 %v236
    %v274 = vunpack.c.l.b16 %v237
    %v275 = vunpack.c.l.b16 %v238
    %v276 = vunpack.c.l.b16 %v239
    %v277 = vunpack.c.l.b16 %v240
    %v278 = vunpack.c.l.b16 %v241
    %v279 = vpack.c.b16 %v264, %v263
    %v280 = vpack.c.b16 %v266, %v265
    %v281 = vpack.c.b16 %v268, %v267
    %v282 = vpack.c.b16 %v270, %v269
    %v283 = vpack.c.b16 %v272, %v271
    %v284 = vpack.c.b16 %v274, %v273
    %v285 = vpack.c.b16 %v276, %v275
    %v286 = vpack.c.b16 %v278, %v277
    %295 = vmatprep.subr.bf16.mxu0 0
    %296 = vmatpush1.bf16.msra.mxu0 %v286
    %297 = vmatprep.subr.bf16.mxu0 0
    %298 = vmatpush1.bf16.msra.mxu0 %v285
    %299 = vmatprep.subr.bf16.mxu0 0
    %300 = vmatpush1.bf16.msra.mxu0 %v284
    %301 = vmatprep.subr.bf16.mxu0 0
    %302 = vmatpush1.bf16.msra.mxu0 %v283
    %303 = vmatprep.subr.bf16.mxu0 0
    %304 = vmatpush1.bf16.msra.mxu0 %v282
    %305 = vmatprep.subr.bf16.mxu0 0
    %306 = vmatpush1.bf16.msra.mxu0 %v281
    %307 = vmatprep.subr.bf16.mxu0 0
    %308 = vmatpush1.bf16.msra.mxu0 %v280
    %309 = vmatprep.subr.bf16.mxu0 0
    %310 = vmatpush1.bf16.msra.mxu0 %v279
    %311 = vmatprep.subr.bf16.mxu0 0
    %312 = vmatpush2.bf16.msra.mxu0 0
    %313 = vmatprep.subr.bf16.mxu0 0
    %314 = vmatpush2.bf16.msra.mxu0 0
    %315 = vmatprep.subr.bf16.mxu0 0
    %316 = vmatpush2.bf16.msra.mxu0 0
    %317 = vmatprep.subr.bf16.mxu0 0
    %318 = vmatpush2.bf16.msra.mxu0 0
    %319 = vmatprep.subr.bf16.mxu0 0
    %320 = vmatpush2.bf16.msra.mxu0 0
    %321 = vmatprep.subr.bf16.mxu0 0
    %322 = vmatpush2.bf16.msra.mxu0 0
    %323 = vmatprep.subr.bf16.mxu0 0
    %324 = vmatpush2.bf16.msra.mxu0 0
    %325 = vmatprep.subr.bf16.mxu0 0
    %326 = vmatpush2.bf16.msra.mxu0 0
    %327 = vmatprep.mubr.bf16.mxu0 0
    %328 = vmatmul.mubr.bf16.gmra.mxu0 %v224
    %v329 = vpop.f32.mrf.mxu0
    %v330 = vadd.f32 %v246, %v329
    %v331 = vpop.f32.mrf.mxu0
    %v332 = vpop.f32.mrf.mxu0
    %v333 = vadd.f32 %v246, %v332
    %v334 = vpop.f32.mrf.mxu0
    %335 = vdwg.mxu0
    %v336 = vmul.f32 %v330, 0.01
    %v337 = vmul.f32 %v333, 0.01
    %v338 = vmax.f32 %v330, %v336
    %v339 = vmax.f32 %v333, %v337
    %v340 = vpack.c.bf16 %v339, %v338
    %s341 = scalar_lea.vmem [#allocation2], 128
    %v342 = vld [vmem:[%s341] sm:$0xf]
    %v343 = vld [vmem:[%s341 + $0x4] sm:$0xf]
    %v344 = vld [vmem:[%s341 + $0x8] sm:$0xf]
    %v345 = vld [vmem:[%s341 + $0xc] sm:$0xf]
    %v346 = vld [vmem:[%s341 + $0x10] sm:$0xf]
    %v347 = vld [vmem:[%s341 + $0x14] sm:$0xf]
    %v348 = vld [vmem:[%s341 + $0x18] sm:$0xf]
    %v349 = vld [vmem:[%s341 + $0x1c] sm:$0xf]
    %v350 = vld [vmem:[%s341 + $0x20] sm:$0xf]
    %v351 = vld [vmem:[%s341 + $0x24] sm:$0xf]
    %v352 = vld [vmem:[%s341 + $0x28] sm:$0xf]
    %v353 = vld [vmem:[%s341 + $0x2c] sm:$0xf]
    %v354 = vld [vmem:[%s341 + $0x30] sm:$0xf]
    %v355 = vld [vmem:[%s341 + $0x34] sm:$0xf]
    %v356 = vld [vmem:[%s341 + $0x38] sm:$0xf]
    %v357 = vld [vmem:[%s341 + $0x3c] sm:$0xf]
    %v358 = vld [vmem:[%s3 + $0x3] sm:$0x1]
    %v359 = vlaneseq
    %v360 = vshrl.u32 %v359, 7
    %v361 = vsub.s32 0, %v360
    %v362 = vrot.slane %v358, %v361
    %v379 = vunpack.c.l.b16 %v342
    %v380 = vunpack.c.l.b16 %v343
    %v381 = vunpack.c.l.b16 %v344
    %v382 = vunpack.c.l.b16 %v345
    %v383 = vunpack.c.l.b16 %v346
    %v384 = vunpack.c.l.b16 %v347
    %v385 = vunpack.c.l.b16 %v348
    %v386 = vunpack.c.l.b16 %v349
    %v387 = vunpack.c.l.b16 %v350
    %v388 = vunpack.c.l.b16 %v351
    %v389 = vunpack.c.l.b16 %v352
    %v390 = vunpack.c.l.b16 %v353
    %v391 = vunpack.c.l.b16 %v354
    %v392 = vunpack.c.l.b16 %v355
    %v393 = vunpack.c.l.b16 %v356
    %v394 = vunpack.c.l.b16 %v357
    %v395 = vpack.c.b16 %v380, %v379
    %v396 = vpack.c.b16 %v382, %v381
    %v397 = vpack.c.b16 %v384, %v383
    %v398 = vpack.c.b16 %v386, %v385
    %v399 = vpack.c.b16 %v388, %v387
    %v400 = vpack.c.b16 %v390, %v389
    %v401 = vpack.c.b16 %v392, %v391
    %v402 = vpack.c.b16 %v394, %v393
    %411 = vmatprep.subr.bf16.mxu0 0
    %412 = vmatpush1.bf16.msra.mxu0 %v402
    %413 = vmatprep.subr.bf16.mxu0 0
    %414 = vmatpush1.bf16.msra.mxu0 %v401
    %415 = vmatprep.subr.bf16.mxu0 0
    %416 = vmatpush1.bf16.msra.mxu0 %v400
    %417 = vmatprep.subr.bf16.mxu0 0
    %418 = vmatpush1.bf16.msra.mxu0 %v399
    %419 = vmatprep.subr.bf16.mxu0 0
    %420 = vmatpush1.bf16.msra.mxu0 %v398
    %421 = vmatprep.subr.bf16.mxu0 0
    %422 = vmatpush1.bf16.msra.mxu0 %v397
    %423 = vmatprep.subr.bf16.mxu0 0
    %424 = vmatpush1.bf16.msra.mxu0 %v396
    %425 = vmatprep.subr.bf16.mxu0 0
    %426 = vmatpush1.bf16.msra.mxu0 %v395
    %427 = vmatprep.subr.bf16.mxu0 0
    %428 = vmatpush2.bf16.msra.mxu0 0
    %429 = vmatprep.subr.bf16.mxu0 0
    %430 = vmatpush2.bf16.msra.mxu0 0
    %431 = vmatprep.subr.bf16.mxu0 0
    %432 = vmatpush2.bf16.msra.mxu0 0
    %433 = vmatprep.subr.bf16.mxu0 0
    %434 = vmatpush2.bf16.msra.mxu0 0
    %435 = vmatprep.subr.bf16.mxu0 0
    %436 = vmatpush2.bf16.msra.mxu0 0
    %437 = vmatprep.subr.bf16.mxu0 0
    %438 = vmatpush2.bf16.msra.mxu0 0
    %439 = vmatprep.subr.bf16.mxu0 0
    %440 = vmatpush2.bf16.msra.mxu0 0
    %441 = vmatprep.subr.bf16.mxu0 0
    %442 = vmatpush2.bf16.msra.mxu0 0
    %443 = vmatprep.mubr.bf16.mxu0 0
    %444 = vmatmul.mubr.bf16.gmra.mxu0 %v340
    %v445 = vpop.f32.mrf.mxu0
    %v446 = vadd.f32 %v362, %v445
    %v447 = vpop.f32.mrf.mxu0
    %v448 = vpop.f32.mrf.mxu0
    %v449 = vadd.f32 %v362, %v448
    %v450 = vpop.f32.mrf.mxu0
    %451 = vdwg.mxu0
    %v452 = vmul.f32 %v446, 0.01
    %v453 = vmul.f32 %v449, 0.01
    %v454 = vmax.f32 %v446, %v452
    %v455 = vmax.f32 %v449, %v453
    %v456 = vpack.c.bf16 %v455, %v454
    %s457 = scalar_lea.vmem [#allocation2], 192
    %v458 = vld [vmem:[%s457] sm:$0xf]
    %v459 = vld [vmem:[%s457 + $0x4] sm:$0xf]
    %v460 = vld [vmem:[%s457 + $0x8] sm:$0xf]
    %v461 = vld [vmem:[%s457 + $0xc] sm:$0xf]
    %v462 = vld [vmem:[%s457 + $0x10] sm:$0xf]
    %v463 = vld [vmem:[%s457 + $0x14] sm:$0xf]
    %v464 = vld [vmem:[%s457 + $0x18] sm:$0xf]
    %v465 = vld [vmem:[%s457 + $0x1c] sm:$0xf]
    %v466 = vld [vmem:[%s457 + $0x20] sm:$0xf]
    %v467 = vld [vmem:[%s457 + $0x24] sm:$0xf]
    %v468 = vld [vmem:[%s457 + $0x28] sm:$0xf]
    %v469 = vld [vmem:[%s457 + $0x2c] sm:$0xf]
    %v470 = vld [vmem:[%s457 + $0x30] sm:$0xf]
    %v471 = vld [vmem:[%s457 + $0x34] sm:$0xf]
    %v472 = vld [vmem:[%s457 + $0x38] sm:$0xf]
    %v473 = vld [vmem:[%s457 + $0x3c] sm:$0xf]
    %v474 = vld [vmem:[%s3 + $0x4] sm:$0x1]
    %v475 = vlaneseq
    %v476 = vshrl.u32 %v475, 7
    %v477 = vsub.s32 0, %v476
    %v478 = vrot.slane %v474, %v477
    %v495 = vunpack.c.l.b16 %v458
    %v496 = vunpack.c.l.b16 %v459
    %v497 = vunpack.c.l.b16 %v460
    %v498 = vunpack.c.l.b16 %v461
    %v499 = vunpack.c.l.b16 %v462
    %v500 = vunpack.c.l.b16 %v463
    %v501 = vunpack.c.l.b16 %v464
    %v502 = vunpack.c.l.b16 %v465
    %v503 = vunpack.c.l.b16 %v466
    %v504 = vunpack.c.l.b16 %v467
    %v505 = vunpack.c.l.b16 %v468
    %v506 = vunpack.c.l.b16 %v469
    %v507 = vunpack.c.l.b16 %v470
    %v508 = vunpack.c.l.b16 %v471
    %v509 = vunpack.c.l.b16 %v472
    %v510 = vunpack.c.l.b16 %v473
    %v511 = vpack.c.b16 %v496, %v495
    %v512 = vpack.c.b16 %v498, %v497
    %v513 = vpack.c.b16 %v500, %v499
    %v514 = vpack.c.b16 %v502, %v501
    %v515 = vpack.c.b16 %v504, %v503
    %v516 = vpack.c.b16 %v506, %v505
    %v517 = vpack.c.b16 %v508, %v507
    %v518 = vpack.c.b16 %v510, %v509
    %527 = vmatprep.subr.bf16.mxu0 0
    %528 = vmatpush1.bf16.msra.mxu0 %v518
    %529 = vmatprep.subr.bf16.mxu0 0
    %530 = vmatpush1.bf16.msra.mxu0 %v517
    %531 = vmatprep.subr.bf16.mxu0 0
    %532 = vmatpush1.bf16.msra.mxu0 %v516
    %533 = vmatprep.subr.bf16.mxu0 0
    %534 = vmatpush1.bf16.msra.mxu0 %v515
    %535 = vmatprep.subr.bf16.mxu0 0
    %536 = vmatpush1.bf16.msra.mxu0 %v514
    %537 = vmatprep.subr.bf16.mxu0 0
    %538 = vmatpush1.bf16.msra.mxu0 %v513
    %539 = vmatprep.subr.bf16.mxu0 0
    %540 = vmatpush1.bf16.msra.mxu0 %v512
    %541 = vmatprep.subr.bf16.mxu0 0
    %542 = vmatpush1.bf16.msra.mxu0 %v511
    %543 = vmatprep.subr.bf16.mxu0 0
    %544 = vmatpush2.bf16.msra.mxu0 0
    %545 = vmatprep.subr.bf16.mxu0 0
    %546 = vmatpush2.bf16.msra.mxu0 0
    %547 = vmatprep.subr.bf16.mxu0 0
    %548 = vmatpush2.bf16.msra.mxu0 0
    %549 = vmatprep.subr.bf16.mxu0 0
    %550 = vmatpush2.bf16.msra.mxu0 0
    %551 = vmatprep.subr.bf16.mxu0 0
    %552 = vmatpush2.bf16.msra.mxu0 0
    %553 = vmatprep.subr.bf16.mxu0 0
    %554 = vmatpush2.bf16.msra.mxu0 0
    %555 = vmatprep.subr.bf16.mxu0 0
    %556 = vmatpush2.bf16.msra.mxu0 0
    %557 = vmatprep.subr.bf16.mxu0 0
    %558 = vmatpush2.bf16.msra.mxu0 0
    %559 = vmatprep.mubr.bf16.mxu0 0
    %560 = vmatmul.mubr.bf16.gmra.mxu0 %v456
    %v561 = vpop.f32.mrf.mxu0
    %v562 = vadd.f32 %v478, %v561
    %v563 = vpop.f32.mrf.mxu0
    %v564 = vpop.f32.mrf.mxu0
    %v565 = vadd.f32 %v478, %v564
    %v566 = vpop.f32.mrf.mxu0
    %567 = vdwg.mxu0
    %v568 = vpack.c.bf16 %v565, %v562
    %v570 = vunpack.c.l.b16 %v568
    %v571 = vunpack.c.h.b16 %v568
    %v572 = vpack.c.b16 %v570, %v570
    %v573 = vpack.c.b16 %v571, %v571
    %576 = vst [vmem:[%s4] sm:$0xf] %v572
    %577 = vst [vmem:[%s4 + $0x4] sm:$0xf] %v573
    // Predicated region
    $region22: #{forward.1} parent=1 // pred_check
      _
    $region23: #{forward.1} parent=1 // pred_check_branch
      %579 = sbr.rel (0) target = $region25
    $region24: #{forward.1} parent=1 // pred_region
      _
    $region25: #{forward.1} parent=1 // pred_fallthru
      _
    // Predicated region
    $region26: #{forward.1} parent=1 // pred_check
      _
    $region27: #{forward.1} parent=1 // pred_check_branch
      %581 = sbr.rel (0) target = $region29
    $region28: #{forward.1} parent=1 // pred_region
      _
    $region29: #{forward.1} parent=1 // pred_fallthru
      _
    %582 = vsyncpa [#allocation3], 1

</llo_original>
